<compile_context>
chip_gen: v6e
topology: v6e:2x2x1
jax: 0.10.0
libtpu: 0.0.40
codegen_flags: <defaults>
</compile_context>

<pallas_src>
import functools

import jax
import jax.numpy as jnp
from jax.experimental import pallas as pl
from jax.experimental.pallas import tpu as pltpu

_NEG_FILL = -1e30


def _round_up(x, m):
    return ((x + m - 1) // m) * m


def _detect_tpu():
    """Returns (per-core VMEM bytes, # tensorcores) with conservative fallbacks."""
    vmem_bytes = 128 * 1024 * 1024
    num_cores = 1
    try:
        info = pltpu.get_tpu_info()
        vmem_bytes = int(getattr(info, "vmem_capacity_bytes", vmem_bytes))
        num_cores = int(getattr(info, "num_cores",
                        getattr(info, "tensorcores_per_chip",
                                getattr(info, "num_tensorcores", 1))))
    except Exception:
        pass
    return vmem_bytes, num_cores


def _kd_kernel(s_ref, t_ref, out_ref, acc_ref, *, inv_temp):
    """Processes one (block_batch, C) tile of student/teacher logits.

    Grid = (num_partials, steps); axis 1 is the reduction axis.  Each step
    contributes a single (1,1) partial to a tiny VMEM accumulator; the result
    is stored once in the epilogue.
    """
    k = pl.program_id(1)

    @pl.when(k == 0)
    def _init():
        acc_ref[...] = jnp.zeros_like(acc_ref)

    inv_t = jnp.float32(inv_temp)
    s_raw = s_ref[...]
    t_raw = t_ref[...]

    # Row max in the native dtype (bf16 VALU on v6e/v7x); exact, since max
    # commutes with the positive 1/T scale applied below.
    s_max = jnp.max(s_raw, axis=-1, keepdims=True).astype(jnp.float32)
    t_max = jnp.max(t_raw, axis=-1, keepdims=True).astype(jnp.float32)

    # 1/T folded into the shift pass -> no standalone x*1/T full-tile arrays.
    s_shift = (s_raw.astype(jnp.float32) - s_max) * inv_t
    t_shift = (t_raw.astype(jnp.float32) - t_max) * inv_t

    # Student: only the per-row log-sum-exp is needed (not full log_softmax).
    s_lse = jnp.log(jnp.sum(jnp.exp(s_shift), axis=-1, keepdims=True))

    # Teacher: unnormalized softmax pieces.
    t_exp = jnp.exp(t_shift)
    t_sum = jnp.sum(t_exp, axis=-1, keepdims=True)
    log_t_sum = jnp.log(t_sum)

    # Per-row KL via sum_c p_t == 1; normalization deferred to after the lane
    # reduction so it only touches a (rows, 1) vector.
    weighted = jnp.sum(t_exp * (t_shift - s_shift), axis=-1, keepdims=True)
    row_kl = weighted / t_sum + (s_lse - log_t_sum)

    # Single (1,1) partial per step; avoids lane-sparse (rows,1) accumulator
    # traffic on the scarce vld/vst slots.
    acc_ref[...] += jnp.sum(row_kl, axis=0, keepdims=True)

    @pl.when(k == pl.num_programs(1) - 1)
    def _finalize():
        out_ref[0] = acc_ref[...]


def knowledge_distillation_loss(student_logits, teacher_logits, temperature, *,
                                block_batch=None, num_partials=None,
                                vmem_limit_bytes=None):
    assert student_logits.shape == teacher_logits.shape
    assert student_logits.ndim == 2, "expects (batch, num_classes) logits"
    assert jnp.issubdtype(student_logits.dtype, jnp.floating)
    assert jnp.issubdtype(teacher_logits.dtype, jnp.floating)
    B, C = student_logits.shape

    itemsizes = [jnp.dtype(a.dtype).itemsize
                 for a in (student_logits, teacher_logits)]
    # Min sublane multiple per dtype: 8 rows (f32), 16 (bf16/f16), 32 (int8).
    sublane = max({4: 8, 2: 16, 1: 32}.get(i, 8) for i in itemsizes)

    vmem_cap, num_cores = _detect_tpu()
    if vmem_limit_bytes is None:
        # Half the per-core physical VMEM, capped at 64 MiB (v5e/v6e: 128 MiB
        # physical; v7x: only 64 MiB per core).
        vmem_limit_bytes = max(16 << 20, min(vmem_cap // 2, 64 << 20))

    if num_partials is None:
        # Leading "parallel" axis only pays off with >1 TensorCore (v7x);
        # on single-TC v5e/v6e it is pure init/epilogue/padding overhead.
        num_partials = 2 if (num_cores >= 2 and B >= 2 * sublane) else 1

    c_pad = _round_up(C, 128)

    if block_batch is None:
        # Budget VMEM for the double-buffered input tiles AND the f32 compute
        # intermediates (~4 live full-width f32 arrays), with headroom.
        bytes_per_row = sum(2 * c_pad * i for i in itemsizes)   # 2 bufs / input
        bytes_per_row += 4 * c_pad * 4                          # f32 temporaries
        rows = int(0.7 * vmem_limit_bytes) // max(1, bytes_per_row)
        rows = max(sublane, min(1024, (rows // sublane) * sublane))
        block_batch = min(rows, _round_up(pl.cdiv(B, num_partials), sublane))
    block_batch = _round_up(block_batch, sublane)

    steps = pl.cdiv(B, num_partials * block_batch)
    b_pad = num_partials * block_batch * steps

    def _pad(x):
        # Class padding: huge negative logit -> exactly-zero probability and
        # exactly-zero KL contribution.  Batch padding: zero logits -> both
        # distributions uniform and identical -> exactly-zero KL.
        if c_pad != C:
            neg = float(max(float(jnp.finfo(x.dtype).min), _NEG_FILL))
            x = jnp.pad(x, ((0, 0), (0, c_pad - C)), constant_values=neg)
        if b_pad != B:
            x = jnp.pad(x, ((0, b_pad - B), (0, 0)))
        return x

    student_logits = _pad(student_logits)
    teacher_logits = _pad(teacher_logits)

    kernel = functools.partial(_kd_kernel, inv_temp=1.0 / float(temperature))

    def in_map(p, k):
        return (p * steps + k, 0)

    cost = pl.CostEstimate(
        flops=12 * b_pad * c_pad,
        transcendentals=2 * b_pad * c_pad + 2 * b_pad,
        bytes_accessed=sum(b_pad * c_pad * i for i in itemsizes)
        + num_partials * 4,
    )

    partials = pl.pallas_call(
        kernel,
        out_shape=jax.ShapeDtypeStruct((num_partials, 1, 1), jnp.float32),
        grid_spec=pltpu.PrefetchScalarGridSpec(
            num_scalar_prefetch=0,
            grid=(num_partials, steps),
            in_specs=[
                pl.BlockSpec((block_batch, c_pad), in_map),
                pl.BlockSpec((block_batch, c_pad), in_map),
            ],
            out_specs=pl.BlockSpec((1, 1, 1), lambda p, k: (p, 0, 0)),
            scratch_shapes=[pltpu.VMEM((1, 1), jnp.float32)],
        ),
        compiler_params=pltpu.CompilerParams(
            dimension_semantics=("parallel", "arbitrary"),
            vmem_limit_bytes=int(vmem_limit_bytes),
        ),
        cost_estimate=cost,
    )(student_logits, teacher_logits)

    scale = jnp.float32(float(temperature) ** 2 / B)
    return jnp.sum(partials) * scale


def _reference(student_logits, teacher_logits, temperature):
    s = student_logits.astype(jnp.float32) / temperature
    t = teacher_logits.astype(jnp.float32) / temperature
    log_p_s = jax.nn.log_softmax(s, axis=1)
    p_t = jax.nn.softmax(t, axis=1)
    log_p_t = jax.nn.log_softmax(t, axis=1)
    kl = jnp.sum(p_t * (log_p_t - log_p_s)) / student_logits.shape[0]
    return kl * temperature ** 2


if __name__ == "__main__":
    key = jax.random.PRNGKey(0)
    k1, k2, k3, k4, k5, k6 = jax.random.split(key, 6)

    # Case 1: f32, evenly tiled, single reduction step.
    B1, C1, T1 = 16, 128, 4.0
    s1 = jax.random.normal(k1, (B1, C1), dtype=jnp.float32) * 3.0
    t1 = jax.random.normal(k2, (B1, C1), dtype=jnp.float32) * 3.0
    loss1 = jax.block_until_ready(knowledge_distillation_loss(s1, t1, T1))
    ref1 = _reference(s1, t1, T1)
    assert jnp.allclose(loss1, ref1, rtol=1e-4, atol=1e-5), (loss1, ref1)

    # Case 2: bf16 logits (half the HBM bytes), ragged batch AND ragged class
    # count (exercises the zero-KL batch/class padding) plus a multi-step
    # reduction axis (exercises the (1,1) accumulator across grid steps).
    B2, C2, T2 = 40, 100, 2.5
    s2 = (jax.random.normal(k3, (B2, C2), dtype=jnp.float32) * 3.0).astype(jnp.bfloat16)
    t2 = (jax.random.normal(k4, (B2, C2), dtype=jnp.float32) * 3.0).astype(jnp.bfloat16)
    loss2 = jax.block_until_ready(
        knowledge_distillation_loss(s2, t2, T2, block_batch=16))
    ref2 = _reference(s2, t2, T2)
    assert jnp.allclose(loss2, ref2, rtol=2e-3, atol=2e-3), (loss2, ref2)

    # Case 3: forced 2-partial "parallel" axis (what a 2-TC v7x would use);
    # correct (just sequential) on single-TC chips.
    B3, C3, T3 = 48, 128, 3.0
    s3 = jax.random.normal(k5, (B3, C3), dtype=jnp.float32) * 2.0
    t3 = jax.random.normal(k6, (B3, C3), dtype=jnp.float32) * 2.0
    loss3 = jax.block_until_ready(
        knowledge_distillation_loss(s3, t3, T3, block_batch=8, num_partials=2))
    ref3 = _reference(s3, t3, T3)
    assert jnp.allclose(loss3, ref3, rtol=1e-4, atol=1e-5), (loss3, ref3)

    print("KERNEL_OK")
</pallas_src>

<mosaic_0001>
module attributes {stable_mosaic.version = 11 : i64} {
  func.func @_kd_kernel(%arg0: i32, %arg1: i32, %arg2: memref<16x128xf32, #tpu.memory_space<vmem>>, %arg3: memref<16x128xf32, #tpu.memory_space<vmem>>, %arg4: memref<1x1x1xf32, #tpu.memory_space<vmem>>, %arg5: memref<1x1xf32, #tpu.memory_space<vmem>>) attributes {dimension_semantics = [#tpu.dimension_semantics<parallel>, #tpu.dimension_semantics<arbitrary>], iteration_bounds = array<i64: 1, 1>, scalar_prefetch = 0 : i64, scratch_operands = 1 : i64, tpu.core_type = #tpu.core_type<tc>, window_params = [{transform_indices = @transform_0, window_bounds = array<i64: 16, 128>}, {transform_indices = @transform_1, window_bounds = array<i64: 16, 128>}, {transform_indices = @transform_2, window_bounds = array<i64: 1, 1, 1>}]} {
    %c0_i32 = arith.constant 0 : i32
    %0 = arith.cmpi eq, %arg1, %c0_i32 : i32
    %1 = arith.extui %0 : i1 to i32
    %c0_i32_0 = arith.constant 0 : i32
    %2 = arith.cmpi ne, %1, %c0_i32_0 : i32
    scf.if %2 {
      %cst_17 = arith.constant 0.000000e+00 : f32
      %40 = vector.broadcast %cst_17 : f32 to vector<1x1xf32>
      %c0_18 = arith.constant 0 : index
      %c0_19 = arith.constant 0 : index
      %41 = vector.load %arg5[%c0_18, %c0_19] : memref<1x1xf32, #tpu.memory_space<vmem>>, vector<1x1xf32>
      tpu.vector_store %arg5[%c0_18, %c0_19], %40 {strides = array<i32>} : memref<1x1xf32, #tpu.memory_space<vmem>>, vector<1x1xf32>,
    } else {
    }
    %c0 = arith.constant 0 : index
    %c0_1 = arith.constant 0 : index
    %3 = vector.load %arg2[%c0, %c0_1] : memref<16x128xf32, #tpu.memory_space<vmem>>, vector<16x128xf32>
    %c0_2 = arith.constant 0 : index
    %c0_3 = arith.constant 0 : index
    %4 = vector.load %arg3[%c0_2, %c0_3] : memref<16x128xf32, #tpu.memory_space<vmem>>, vector<16x128xf32>
    %cst = arith.constant dense<0xFF800000> : vector<16xf32>
    %5 = vector.multi_reduction <maximumf>, %3, %cst [1] : vector<16x128xf32> to vector<16xf32>
    %6 = vector.shape_cast %5 : vector<16xf32> to vector<16x1xf32>
    %cst_4 = arith.constant dense<0xFF800000> : vector<16xf32>
    %7 = vector.multi_reduction <maximumf>, %4, %cst_4 [1] : vector<16x128xf32> to vector<16xf32>
    %8 = vector.shape_cast %7 : vector<16xf32> to vector<16x1xf32>
    %9 = vector.broadcast %6 : vector<16x1xf32> to vector<16x128xf32>
    %10 = arith.subf %3, %9 : vector<16x128xf32>
    %cst_5 = arith.constant 2.500000e-01 : f32
    %11 = vector.broadcast %cst_5 : f32 to vector<16x128xf32>
    %12 = arith.mulf %10, %11 : vector<16x128xf32>
    %13 = vector.broadcast %8 : vector<16x1xf32> to vector<16x128xf32>
    %14 = arith.subf %4, %13 : vector<16x128xf32>
    %cst_6 = arith.constant 2.500000e-01 : f32
    %15 = vector.broadcast %cst_6 : f32 to vector<16x128xf32>
    %16 = arith.mulf %14, %15 : vector<16x128xf32>
    %17 = math.exp %12 : vector<16x128xf32>
    %cst_7 = arith.constant dense<0.000000e+00> : vector<16xf32>
    %18 = vector.multi_reduction <add>, %17, %cst_7 [1] : vector<16x128xf32> to vector<16xf32>
    %19 = vector.shape_cast %18 : vector<16xf32> to vector<16x1xf32>
    %20 = math.log %19 : vector<16x1xf32>
    %21 = math.exp %16 : vector<16x128xf32>
    %cst_8 = arith.constant dense<0.000000e+00> : vector<16xf32>
    %22 = vector.multi_reduction <add>, %21, %cst_8 [1] : vector<16x128xf32> to vector<16xf32>
    %23 = vector.shape_cast %22 : vector<16xf32> to vector<16x1xf32>
    %24 = math.log %23 : vector<16x1xf32>
    %25 = arith.subf %16, %12 : vector<16x128xf32>
    %26 = arith.mulf %21, %25 : vector<16x128xf32>
    %cst_9 = arith.constant dense<0.000000e+00> : vector<16xf32>
    %27 = vector.multi_reduction <add>, %26, %cst_9 [1] : vector<16x128xf32> to vector<16xf32>
    %28 = vector.shape_cast %27 : vector<16xf32> to vector<16x1xf32>
    %29 = arith.divf %28, %23 : vector<16x1xf32>
    %30 = arith.subf %20, %24 : vector<16x1xf32>
    %31 = arith.addf %29, %30 : vector<16x1xf32>
    %c0_10 = arith.constant 0 : index
    %c0_11 = arith.constant 0 : index
    %32 = vector.load %arg5[%c0_10, %c0_11] : memref<1x1xf32, #tpu.memory_space<vmem>>, vector<1x1xf32>
    %cst_12 = arith.constant dense<0.000000e+00> : vector<1xf32>
    %33 = vector.multi_reduction <add>, %31, %cst_12 [0] : vector<16x1xf32> to vector<1xf32>
    %34 = vector.shape_cast %33 : vector<1xf32> to vector<1x1xf32>
    %35 = arith.addf %32, %34 : vector<1x1xf32>
    %c0_13 = arith.constant 0 : index
    %c0_14 = arith.constant 0 : index
    %36 = vector.load %arg5[%c0_13, %c0_14] : memref<1x1xf32, #tpu.memory_space<vmem>>, vector<1x1xf32>
    tpu.vector_store %arg5[%c0_13, %c0_14], %35 {strides = array<i32>} : memref<1x1xf32, #tpu.memory_space<vmem>>, vector<1x1xf32>,
    %c0_i32_15 = arith.constant 0 : i32
    %37 = arith.cmpi eq, %arg1, %c0_i32_15 : i32
    %38 = arith.extui %37 : i1 to i32
    %c0_i32_16 = arith.constant 0 : i32
    %39 = arith.cmpi ne, %38, %c0_i32_16 : i32
    scf.if %39 {
      %c0_17 = arith.constant 0 : index
      %c0_18 = arith.constant 0 : index
      %40 = vector.load %arg5[%c0_17, %c0_18] : memref<1x1xf32, #tpu.memory_space<vmem>>, vector<1x1xf32>
      %c0_19 = arith.constant 0 : index
      %c0_20 = arith.constant 0 : index
      %c0_21 = arith.constant 0 : index
      %41 = vector.load %arg4[%c0_19, %c0_20, %c0_21] : memref<1x1x1xf32, #tpu.memory_space<vmem>>, vector<1x1x1xf32>
      %42 = vector.shape_cast %41 : vector<1x1x1xf32> to vector<1x1xf32>
      %43 = vector.shape_cast %40 : vector<1x1xf32> to vector<1x1x1xf32>
      tpu.vector_store %arg4[%c0_19, %c0_20, %c0_21], %43 {strides = array<i32>} : memref<1x1x1xf32, #tpu.memory_space<vmem>>, vector<1x1x1xf32>,
    } else {
    }
    return
  }
  func.func @transform_0(%arg0: i32, %arg1: i32) -> (i32, i32) {
    %c1_i32 = arith.constant 1 : i32
    %0 = arith.muli %arg0, %c1_i32 : i32
    %1 = arith.addi %0, %arg1 : i32
    %c0_i32 = arith.constant 0 : i32
    %c0_i32_0 = arith.constant 0 : i32
    return %1, %c0_i32 : i32, i32
  }
  func.func @transform_1(%arg0: i32, %arg1: i32) -> (i32, i32) {
    %c1_i32 = arith.constant 1 : i32
    %0 = arith.muli %arg0, %c1_i32 : i32
    %1 = arith.addi %0, %arg1 : i32
    %c0_i32 = arith.constant 0 : i32
    %c0_i32_0 = arith.constant 0 : i32
    return %1, %c0_i32 : i32, i32
  }
  func.func @transform_2(%arg0: i32, %arg1: i32) -> (i32, i32, i32) {
    %c0_i32 = arith.constant 0 : i32
    %c0_i32_0 = arith.constant 0 : i32
    %c0_i32_1 = arith.constant 0 : i32
    return %arg0, %c0_i32, %c0_i32_0 : i32, i32, i32
  }
}

</mosaic_0001>

<llo_original>
// kernel: tpu_custom_call.1
$region0: #{tpu_custom_call.1}
  #allocation0 [shape = 'u32[]', space=smem, size = 0x4, offset = 0x4, fixed_abs, tag = 'smem constant byte address 0x4 - core index']
  #allocation1 [shape = 'u32[144,128]{1,0:T(1,128)}', space=vmem, size = 0x12000, scoped, tag = 'internal scratch']
  #allocation2 [shape = 'f32[1,1]{1,0:T(1,128)}', space=vmem, size = 0x200, scoped, tag = 'scratch operand']
  %s0 = inlined_call_operand.hbm [shape: f32[16,128], index: 0, kind: input, shape index: {}]
  %s1 = inlined_call_operand.hbm [shape: f32[16,128], index: 1, kind: input, shape index: {}]
  %s2 = inlined_call_operand.hbm [shape: f32[1,1,1], index: 2, kind: output, shape index: {}]
  %s3 = sld [smem:[#allocation0]]
  $region34: #{tpu_custom_call.1} parent=0
    _
  %s5 = ssub.s32 1, %s3
  %s6 = scalar_select 0, %s5, %s3
  $region1: #{tpu_custom_call.1} parent=0
    #allocation3 [shape = 'u8[8192]{0}', space=vmem, size = 0x2000, scoped, tag = 'input window, operand 0, single buffered']
    #allocation4 [shape = 's32[1]{0}', space=sflag, size = 0x4, scoped, tag = 'scoped memory for tpu_custom_call.1']
    #allocation5 [shape = 's32[1]{0}', space=sflag, size = 0x4, scoped, tag = 'scoped memory for tpu_custom_call.1']
    #allocation6 [shape = 'u8[8192]{0}', space=vmem, size = 0x2000, scoped, tag = 'input window, operand 1, single buffered']
    #allocation7 [shape = 's32[1]{0}', space=sflag, size = 0x4, scoped, tag = 'scoped memory for tpu_custom_call.1']
    #allocation8 [shape = 'u8[512]{0}', space=vmem, size = 0x400, scoped, tag = 'output window, operand 0, single buffered']
    %7 = vsyncpa [#allocation4], 0
    %8 = vsyncpa [#allocation7], 0
    %9 = vsyncpa [#allocation5], 0
    // Predicated region
    $region2: #{tpu_custom_call.1} parent=1 // pred_check
      _
    $region3: #{tpu_custom_call.1} parent=1 // pred_check_branch
      %11 = sbr.rel (0) target = $region5
    $region4: #{tpu_custom_call.1} parent=1 // pred_region
      %s12 = sadd.s32 0, 0
      %s13 = smul.u32 2, %s12
      %s15 = ssub.s32 256, 256
      %16 = vsyncadd [#allocation4], %s15
      %s17 = smul.addr %s13, 128
      %s18 = scalar_lea.hbm %s0, %s17
      %s19 = sshll.u32 [#allocation3], 4
      %s20 = int_to_ptr.vmem [resolvable:$true] %s19
      %25 = dma.hbm_to_vmem [thread:$0]  %s18, 256, %s20, [#allocation4], 128, 128, 8
    $region5: #{tpu_custom_call.1} parent=1 // pred_fallthru
      _
    // Predicated region
    $region6: #{tpu_custom_call.1} parent=1 // pred_check
      _
    $region7: #{tpu_custom_call.1} parent=1 // pred_check_branch
      %27 = sbr.rel (0) target = $region9
    $region8: #{tpu_custom_call.1} parent=1 // pred_region
      %s28 = sadd.s32 0, 0
      %s29 = smul.u32 2, %s28
      %s31 = ssub.s32 256, 256
      %32 = vsyncadd [#allocation7], %s31
      %s33 = smul.addr %s29, 128
      %s34 = scalar_lea.hbm %s1, %s33
      %s35 = sshll.u32 [#allocation6], 4
      %s36 = int_to_ptr.vmem [resolvable:$true] %s35
      %41 = dma.hbm_to_vmem [thread:$0]  %s34, 256, %s36, [#allocation7], 128, 128, 8
    $region9: #{tpu_custom_call.1} parent=1 // pred_fallthru
      _
    // Predicated region
    $region10: #{tpu_custom_call.1} parent=1 // pred_check
      _
    $region11: #{tpu_custom_call.1} parent=1 // pred_check_branch
      %43 = sbr.rel (0) target = $region13
    $region12: #{tpu_custom_call.1} parent=1 // pred_region
      %44 = dma.done [#allocation4], 256
    $region13: #{tpu_custom_call.1} parent=1 // pred_fallthru
      _
    // Predicated region
    $region14: #{tpu_custom_call.1} parent=1 // pred_check
      _
    $region15: #{tpu_custom_call.1} parent=1 // pred_check_branch
      %46 = sbr.rel (0) target = $region17
    $region16: #{tpu_custom_call.1} parent=1 // pred_region
      %47 = dma.done [#allocation7], 256
    $region17: #{tpu_custom_call.1} parent=1 // pred_fallthru
      _
    %s48 = sadd.s32 0, 0
    %s49 = smul.u32 2, %s48
    %s50 = sadd.s32 0, 0
    %s51 = smul.u32 2, %s50
    %p52 = scmp.eq.s32.totalorder 0, 0
    // Predicated region
    $region18: #{tpu_custom_call.1} parent=1 // pred_check
      %p53 = pneg %p52
    $region19: #{tpu_custom_call.1} parent=1 // pred_check_branch
      %55 = sbr.rel (%p53) target = $region21
    $region20: #{tpu_custom_call.1} parent=1 // pred_region
      %vm56 = vcmask 0
      %57 = vst.msk [vmem:[#allocation2] sm:$0x1] %vm56, 0.0
    $region21: #{tpu_custom_call.1} parent=1 // pred_fallthru
      _
    %v58 = vld [vmem:[#allocation3] sm:$0xff]
    %v59 = vld [vmem:[#allocation3 + $0x8] sm:$0xff]
    %v60 = vld [vmem:[#allocation6] sm:$0xff]
    %v61 = vld [vmem:[#allocation6 + $0x8] sm:$0xff]
    %62 = vmax.xlane.f32.xlu0 %v58
    %v63 = vpop.xlane.xlu0 %62
    %64 = vmax.xlane.f32.xlu0 %v59
    %v65 = vpop.xlane.xlu0 %64
    %66 = vmax.xlane.f32.xlu0 %v60
    %v67 = vpop.xlane.xlu0 %66
    %68 = vmax.xlane.f32.xlu0 %v61
    %v69 = vpop.xlane.xlu0 %68
    %v70 = vsub.f32 %v58, %v63
    %v71 = vsub.f32 %v59, %v65
    %v72 = vmul.f32 %v70, 0.25
    %v73 = vmul.f32 %v71, 0.25
    %v74 = vsub.f32 %v60, %v67
    %v75 = vsub.f32 %v61, %v69
    %v76 = vmul.f32 %v74, 0.25
    %v77 = vmul.f32 %v75, 0.25
    %v78 = vmul.f32 %v72, 1.442695
    %v79 = vpow.pop %v78
    %v80 = vmul.f32 %v73, 1.442695
    %v81 = vpow.pop %v80
    %82 = vadd.xlane.f32.xlu0 %v79
    %v83 = vpop.xlane.xlu0 %82
    %84 = vadd.xlane.f32.xlu0 %v81
    %v85 = vpop.xlane.xlu0 %84
    %v86 = vlog2.pop %v83
    %v87 = vmul.f32 %v86, 0.6931472
    %v88 = vlog2.pop %v85
    %v89 = vmul.f32 %v88, 0.6931472
    %v90 = vmul.f32 %v76, 1.442695
    %v91 = vpow.pop %v90
    %v92 = vmul.f32 %v77, 1.442695
    %v93 = vpow.pop %v92
    %94 = vadd.xlane.f32.xlu0 %v91
    %v95 = vpop.xlane.xlu0 %94
    %96 = vadd.xlane.f32.xlu0 %v93
    %v97 = vpop.xlane.xlu0 %96
    %v98 = vlog2.pop %v95
    %v99 = vmul.f32 %v98, 0.6931472
    %v100 = vlog2.pop %v97
    %v101 = vmul.f32 %v100, 0.6931472
    %v102 = vsub.f32 %v76, %v72
    %v103 = vsub.f32 %v77, %v73
    %v104 = vmul.f32 %v91, %v102
    %v105 = vmul.f32 %v93, %v103
    %106 = vadd.xlane.f32.xlu0 %v104
    %v107 = vpop.xlane.xlu0 %106
    %108 = vadd.xlane.f32.xlu0 %v105
    %v109 = vpop.xlane.xlu0 %108
    %v110 = vrcp.pop %v95
    %v111 = vmul.f32 %v107, %v110
    %v112 = vrcp.pop %v97
    %v113 = vmul.f32 %v109, %v112
    %v114 = vsub.f32 %v87, %v99
    %v115 = vsub.f32 %v89, %v101
    %v116 = vadd.f32 %v111, %v114
    %v117 = vadd.f32 %v113, %v115
    %v118 = vld [vmem:[#allocation2] sm:$0x1]
    %v119 = vadd.f32 %v116, %v117
    %v120 = vrot.slane %v119, 4
    %v121 = vadd.f32 %v119, %v120
    %v122 = vrot.slane %v121, 2
    %v123 = vadd.f32 %v121, %v122
    %v124 = vrot.slane %v123, 1
    %v125 = vadd.f32 %v123, %v124
    %v126 = vadd.f32 %v118, %v125
    %vm127 = vcmask 0
    %128 = vst.msk [vmem:[#allocation2] sm:$0x1] %vm127, %v126
    // Predicated region
    $region22: #{tpu_custom_call.1} parent=1 // pred_check
      %p129 = pneg %p52
    $region23: #{tpu_custom_call.1} parent=1 // pred_check_branch
      %131 = sbr.rel (%p129) target = $region25
    $region24: #{tpu_custom_call.1} parent=1 // pred_region
      %v132 = vld [vmem:[#allocation2] sm:$0x1]
      %133 = vst.msk [vmem:[#allocation8] sm:$0x1] %vm127, %v132
    $region25: #{tpu_custom_call.1} parent=1 // pred_fallthru
      _
    // Predicated region
    $region26: #{tpu_custom_call.1} parent=1 // pred_check
      _
    $region27: #{tpu_custom_call.1} parent=1 // pred_check_branch
      %135 = sbr.rel (0) target = $region29
    $region28: #{tpu_custom_call.1} parent=1 // pred_region
      %s137 = ssub.s32 16, 16
      %138 = vsyncadd [#allocation5], %s137
      %s140 = sshll.u32 [#allocation8], 4
      %s141 = int_to_ptr.vmem [resolvable:$true] %s140
      %143 = dma.vmem_to_hbm [thread:$0]  %s141, 16, %s2, [#allocation5]
    $region29: #{tpu_custom_call.1} parent=1 // pred_fallthru
      _
    // Predicated region
    $region30: #{tpu_custom_call.1} parent=1 // pred_check
      _
    $region31: #{tpu_custom_call.1} parent=1 // pred_check_branch
      %145 = sbr.rel (0) target = $region33
    $region32: #{tpu_custom_call.1} parent=1 // pred_region
      %146 = dma.done [#allocation5], 16
    $region33: #{tpu_custom_call.1} parent=1 // pred_fallthru
      _
    %147 = vsyncpa [#allocation4], 1
    %148 = vsyncpa [#allocation7], 1
    %149 = vsyncpa [#allocation5], 1

</llo_original>
